<compile_context>
chip_gen: v5e
topology: v5e:2x2
jax: 0.10.0
libtpu: 0.0.40
codegen_flags: <defaults>
</compile_context>

<pallas_src>
import functools

import jax
import jax.numpy as jnp
from jax.experimental import pallas as pl
from jax.experimental.pallas import tpu as pltpu

_LANE = 128
_SUBLANE = 8
_MIB = 1024 * 1024

# Only materialize the mask via Pallas when it is at least this many elements;
# below that, the fused plain-XLA expression is strictly cheaper.
_DEFAULT_MIN_PALLAS_ELEMENTS = 1 << 20

# Lane cap for one slot-axis tile: bounds even a minimal (8, tm) tile to
# 256 KiB so huge max_slots never exceeds the VMEM limit.
_SLOT_TILE_CAP = 32 * 1024

# Whole-counts mode keeps the entire (batch_pad, 1) counts array resident in
# VMEM (lane-padded to 128 lanes -> 512 B/row); cap that buffer at ~2 MiB.
_WHOLE_COUNTS_MAX_ROWS = 4096

# Flipped to False (once per process) if this toolchain rejects bool output
# refs, so the int8 compat path does not re-probe on every call.
_BOOL_REFS_OK = True


def _cdiv(a: int, b: int) -> int:
    return -(-a // b)


def _round_up(x: int, m: int) -> int:
    return _cdiv(x, m) * m


@functools.cache
def _vmem_capacity_bytes() -> int:
    try:
        return int(pltpu.get_tpu_info().vmem_capacity_bytes)
    except Exception:  # pragma: no cover - info query unavailable
        return 64 * _MIB  # conservative (v7x per-core figure)


def _target_tile_bytes() -> int:
    # ~4-8 MiB on v7x (64 MiB VMEM), ~12-16 MiB on v5e/v6e (128 MiB VMEM):
    # large enough that the ~0.35us per-grid-step overhead is a small fraction
    # of the store time, small enough that double-buffered tiles fit the
    # scoped VMEM budget.
    return int(min(16 * _MIB, max(4 * _MIB, _vmem_capacity_bytes() // 10)))


def _choose_tiles(batch, max_slots, batch_tile, slot_tile):
    m_pad = _round_up(max_slots, _LANE)
    batch_pad8 = _round_up(batch, _SUBLANE)
    target = _target_tile_bytes()  # bool/int8 output -> bytes == elements

    # Slot axis: a single lane-dense tile unless max_slots is huge.
    if slot_tile is not None:
        tm = max(_LANE, min(_round_up(slot_tile, _LANE), m_pad))
    else:
        tm = min(m_pad, _SLOT_TILE_CAP)
    nm = _cdiv(m_pad, tm)
    tm = _round_up(_cdiv(m_pad, nm), _LANE)

    # Batch axis: pick the number of tiles first so padding stays at a few
    # rows, instead of rounding the batch up to a full tile multiple.
    if batch_tile is not None:
        tb = max(_round_up(batch_tile, _SUBLANE), _SUBLANE)
        nb = _cdiv(batch_pad8, tb)
    else:
        tb_target = max(_SUBLANE, (target // tm) // _SUBLANE * _SUBLANE)
        nb = _cdiv(batch_pad8, tb_target)
        # v7x megacore: keep at least two grid steps to shard across both
        # TensorCores whenever the batch allows (negligible cost on v5e/v6e).
        if nb * nm < 2 and batch_pad8 >= 2 * _SUBLANE:
            nb = 2
        tb = _round_up(_cdiv(batch_pad8, nb), _SUBLANE)

    whole_counts = nb * tb <= _WHOLE_COUNTS_MAX_ROWS
    if not whole_counts and batch_tile is None and tb > 2048:
        # Per-tile counts blocks: cap tb so the lane-padded (tb, 1) counts
        # buffers (512 B/row, double-buffered) stay ~2 MiB.
        tb = 2048
        nb = _cdiv(batch_pad8, tb)
        tb = _round_up(_cdiv(batch_pad8, nb), _SUBLANE)
    return tb, nb, tm, nm, whole_counts


def _slot_mask_kernel(counts_ref, out_ref, *, tb, tm, whole_counts):
    # counts_ref: (batch_pad, 1) int32 (whole_counts) or (tb, 1) int32
    # out_ref:    (tb, tm) bool (int8 on the compat path)
    if whole_counts:
        row0 = pl.multiple_of(pl.program_id(0) * tb, _SUBLANE)
        counts = counts_ref[pl.ds(row0, tb), :]
    else:
        counts = counts_ref[...]
    col0 = pl.program_id(1) * tm
    # One int32 row of slot indices; the compare broadcasts it against the
    # (tb, 1) counts, so wide intermediates stay as cheap mask vregs.
    idx = col0 + jax.lax.broadcasted_iota(jnp.int32, (1, tm), 1)
    out_ref[...] = (idx >= counts).astype(out_ref.dtype)


def _pallas_slot_mask(counts_2d, *, tb, nb, tm, nm, out_dtype, whole_counts):
    batch_pad = nb * tb
    m_total = nm * tm
    if whole_counts:
        # Constant index_map: the counts are DMA'd into VMEM once and reused
        # across all grid steps (sliced per-tile in the kernel).
        counts_spec = pl.BlockSpec((batch_pad, 1), lambda i, j: (0, 0))
        counts_vmem = batch_pad * _LANE * 4
    else:
        # Per-batch-tile blocks: refetched only when the batch tile changes.
        counts_spec = pl.BlockSpec((tb, 1), lambda i, j: (i, 0))
        counts_vmem = 2 * tb * _LANE * 4
    tile_bytes = tb * tm * jnp.dtype(out_dtype).itemsize
    vmem_limit = int(min(
        max(32 * _MIB, 2 * tile_bytes + 2 * counts_vmem + 8 * _MIB),
        0.9 * _vmem_capacity_bytes()))
    kernel = functools.partial(
        _slot_mask_kernel, tb=tb, tm=tm, whole_counts=whole_counts)
    out_bytes = batch_pad * m_total * jnp.dtype(out_dtype).itemsize
    return pl.pallas_call(
        kernel,
        out_shape=jax.ShapeDtypeStruct((batch_pad, m_total), out_dtype),
        grid=(nb, nm),
        in_specs=[counts_spec],
        out_specs=pl.BlockSpec((tb, tm), lambda i, j: (i, j)),
        compiler_params=pltpu.CompilerParams(
            dimension_semantics=("parallel", "parallel"),
            vmem_limit_bytes=vmem_limit,
        ),
        cost_estimate=pl.CostEstimate(
            flops=batch_pad * m_total,          # one compare per element
            transcendentals=0,
            bytes_accessed=out_bytes + batch_pad * 4,
        ),
    )(counts_2d)


def create_slot_mask(n_slots, max_slots, *, force_pallas=False,
                     min_pallas_elements=_DEFAULT_MIN_PALLAS_ELEMENTS,
                     batch_tile=None, slot_tile=None, whole_counts=None):
    """Equivalent of CreateSlotMask.forward: mask[b, i] = (i >= n_slots[b])."""
    global _BOOL_REFS_OK
    (batch,) = n_slots.shape
    n_i32 = n_slots.astype(jnp.int32)

    # A compare-vs-iota mask is pure store bandwidth; when XLA fuses it into
    # the consumer it is free, so only take the Pallas path when the mask is
    # large enough that materializing it is the point (or explicitly forced).
    if not force_pallas and batch * max_slots < min_pallas_elements:
        idx = jnp.arange(max_slots, dtype=jnp.int32)
        return idx[None, :] >= n_i32[:, None]

    tb, nb, tm, nm, whole_default = _choose_tiles(
        batch, max_slots, batch_tile, slot_tile)
    if whole_counts is None:
        whole_counts = whole_default
    batch_pad = nb * tb
    if batch_pad != batch:
        # Padded rows get n=0 -> all-True mask rows; sliced off below.
        n_i32 = jnp.pad(n_i32, (0, batch_pad - batch))
    counts_2d = n_i32.reshape(batch_pad, 1)

    call = functools.partial(_pallas_slot_mask, counts_2d, tb=tb, nb=nb,
                             tm=tm, nm=nm, whole_counts=whole_counts)
    if _BOOL_REFS_OK:
        try:
            mask = call(out_dtype=jnp.bool_)
        except Exception:
            # Compat path: this toolchain rejects bool output refs.
            _BOOL_REFS_OK = False
            mask = call(out_dtype=jnp.int8)
    else:
        mask = call(out_dtype=jnp.int8)

    mask = mask[:batch, :max_slots]
    if mask.dtype != jnp.bool_:
        # Compat path only: an extra pass when run eagerly, but it fuses into
        # the consumer under jit (the primary bool path never hits this).
        mask = mask.astype(jnp.bool_)
    return mask


if __name__ == "__main__":
    key = jax.random.PRNGKey(0)
    k1, k2, k3, k4 = jax.random.split(key, 4)

    def reference(n, max_slots):
        idx = jnp.arange(max_slots, dtype=jnp.int32)
        return idx[None, :] >= n.astype(jnp.int32)[:, None]

    cases = []

    # 1) Tiny, typical module shape -> plain-XLA fused fast path (no Pallas).
    n1 = jax.random.randint(k1, (2,), 0, 9, dtype=jnp.int32)
    cases.append((n1, 8, create_slot_mask(n1, 8)))

    # 2) Pallas path: single slot tile, grid split into >= 2 batch tiles
    #    (exercises the v7x two-step rule and the constant-index counts DMA).
    n2 = jax.random.randint(k2, (64,), 0, 201, dtype=jnp.int32)
    cases.append((n2, 200, create_slot_mask(n2, 200, force_pallas=True)))

    # 3) Pallas path: 2-D grid (3 batch tiles x 3 slot tiles) with batch and
    #    lane padding (70 -> 96 rows, 300 -> 384 lanes), in-kernel row slicing.
    n3 = jax.random.randint(k3, (70,), 0, 301, dtype=jnp.int32)
    cases.append((n3, 300, create_slot_mask(n3, 300, force_pallas=True,
                                            batch_tile=32, slot_tile=128)))

    # 4) Pallas path with per-batch-tile counts blocks (the large-batch
    #    fallback mode, exercised here at a small shape via the override).
    n4 = jax.random.randint(k4, (48,), 0, 151, dtype=jnp.int32)
    cases.append((n4, 150, create_slot_mask(n4, 150, force_pallas=True,
                                            batch_tile=16, whole_counts=False)))

    jax.block_until_ready([m for _, _, m in cases])

    for n, max_slots, out in cases:
        ref = reference(n, max_slots)
        assert out.shape == (n.shape[0], max_slots), (out.shape, ref.shape)
        assert out.dtype == jnp.bool_, out.dtype
        assert bool(jnp.array_equal(out, ref))

    print("KERNEL_OK")
</pallas_src>

<mosaic_0001>
module attributes {stable_mosaic.version = 11 : i64} {
  func.func @_slot_mask_kernel(%arg0: i32, %arg1: i32, %arg2: memref<64x1xi32, #tpu.memory_space<vmem>>, %arg3: memref<32x256xi32, #tpu.memory_space<vmem>>) attributes {dimension_semantics = [#tpu.dimension_semantics<parallel>, #tpu.dimension_semantics<parallel>], iteration_bounds = array<i64: 2, 1>, scalar_prefetch = 0 : i64, scratch_operands = 0 : i64, tpu.core_type = #tpu.core_type<tc>, window_params = [{pipeline_mode = #tpu.pipeline_mode<synchronous>, transform_indices = @transform_0, window_bounds = array<i64: 64, 1>}, {transform_indices = @transform_1, window_bounds = array<i64: 32, 256>}]} {
    %c32_i32 = arith.constant 32 : i32
    %0 = arith.muli %arg0, %c32_i32 : i32
    %1 = tpu.assume_multiple %0, 8 : i32
    %2 = arith.index_cast %1 : i32 to index
    %c0 = arith.constant 0 : index
    %3 = vector.load %arg2[%2, %c0] : memref<64x1xi32, #tpu.memory_space<vmem>>, vector<32x1xi32>
    %c256_i32 = arith.constant 256 : i32
    %4 = arith.muli %arg1, %c256_i32 : i32
    %5 = tpu.iota {dimensions = array<i32: 1>} : vector<1x256xi32>
    %6 = vector.broadcast %4 : i32 to vector<1x256xi32>
    %7 = arith.addi %6, %5 : vector<1x256xi32>
    %8 = vector.broadcast %7 : vector<1x256xi32> to vector<32x256xi32>
    %9 = vector.broadcast %3 : vector<32x1xi32> to vector<32x256xi32>
    %10 = arith.cmpi sge, %8, %9 : vector<32x256xi32>
    %c0_0 = arith.constant 0 : index
    %c0_1 = arith.constant 0 : index
    %11 = vector.load %arg3[%c0_0, %c0_1] : memref<32x256xi32, #tpu.memory_space<vmem>>, vector<32x256xi32>
    %12 = arith.extui %10 : vector<32x256xi1> to vector<32x256xi32>
    %cst = arith.constant dense<0> : vector<32x256xi32>
    %13 = arith.cmpi ne, %11, %cst : vector<32x256xi32>
    tpu.vector_store %arg3[%c0_0, %c0_1], %12 {strides = array<i32>} : memref<32x256xi32, #tpu.memory_space<vmem>>, vector<32x256xi32>,
    return
  }
  func.func @transform_0(%arg0: i32, %arg1: i32) -> (i32, i32) {
    %c0_i32 = arith.constant 0 : i32
    %c0_i32_0 = arith.constant 0 : i32
    %c0_i32_1 = arith.constant 0 : i32
    return %c0_i32, %c0_i32_0 : i32, i32
  }
  func.func @transform_1(%arg0: i32, %arg1: i32) -> (i32, i32) {
    %c0_i32 = arith.constant 0 : i32
    return %arg0, %arg1 : i32, i32
  }
}

module attributes {stable_mosaic.version = 11 : i64} {
  func.func @_slot_mask_kernel(%arg0: i32, %arg1: i32, %arg2: memref<64x1xi32, #tpu.memory_space<vmem>>, %arg3: memref<32x256xi8, #tpu.memory_space<vmem>>) attributes {dimension_semantics = [#tpu.dimension_semantics<parallel>, #tpu.dimension_semantics<parallel>], iteration_bounds = array<i64: 2, 1>, scalar_prefetch = 0 : i64, scratch_operands = 0 : i64, tpu.core_type = #tpu.core_type<tc>, window_params = [{pipeline_mode = #tpu.pipeline_mode<synchronous>, transform_indices = @transform_0, window_bounds = array<i64: 64, 1>}, {transform_indices = @transform_1, window_bounds = array<i64: 32, 256>}]} {
    %c32_i32 = arith.constant 32 : i32
    %0 = arith.muli %arg0, %c32_i32 : i32
    %1 = tpu.assume_multiple %0, 8 : i32
    %2 = arith.index_cast %1 : i32 to index
    %c0 = arith.constant 0 : index
    %3 = vector.load %arg2[%2, %c0] : memref<64x1xi32, #tpu.memory_space<vmem>>, vector<32x1xi32>
    %c256_i32 = arith.constant 256 : i32
    %4 = arith.muli %arg1, %c256_i32 : i32
    %5 = tpu.iota {dimensions = array<i32: 1>} : vector<1x256xi32>
    %6 = vector.broadcast %4 : i32 to vector<1x256xi32>
    %7 = arith.addi %6, %5 : vector<1x256xi32>
    %8 = vector.broadcast %7 : vector<1x256xi32> to vector<32x256xi32>
    %9 = vector.broadcast %3 : vector<32x1xi32> to vector<32x256xi32>
    %10 = arith.cmpi sge, %8, %9 : vector<32x256xi32>
    %11 = arith.extui %10 : vector<32x256xi1> to vector<32x256xi8>
    %c0_0 = arith.constant 0 : index
    %c0_1 = arith.constant 0 : index
    %12 = vector.load %arg3[%c0_0, %c0_1] : memref<32x256xi8, #tpu.memory_space<vmem>>, vector<32x256xi8>
    tpu.vector_store %arg3[%c0_0, %c0_1], %11 {strides = array<i32>} : memref<32x256xi8, #tpu.memory_space<vmem>>, vector<32x256xi8>,
    return
  }
  func.func @transform_0(%arg0: i32, %arg1: i32) -> (i32, i32) {
    %c0_i32 = arith.constant 0 : i32
    %c0_i32_0 = arith.constant 0 : i32
    %c0_i32_1 = arith.constant 0 : i32
    return %c0_i32, %c0_i32_0 : i32, i32
  }
  func.func @transform_1(%arg0: i32, %arg1: i32) -> (i32, i32) {
    %c0_i32 = arith.constant 0 : i32
    return %arg0, %arg1 : i32, i32
  }
}

</mosaic_0001>

<llo_original>
// kernel: tpu_custom_call.1
$region0: #{tpu_custom_call.1}
  #allocation0 [shape = 'u32[]', space=smem, size = 0x4, offset = 0x4, fixed_abs, tag = 'smem constant byte address 0x4 - core index']
  #allocation1 [shape = 'u32[72,128]{1,0:T(1,128)}', space=vmem, size = 0x9000, scoped, tag = 'internal scratch']
  %s0 = inlined_call_operand.vmem [shape: s32[64,1], index: 0, kind: input, shape index: {}]
  %s1 = inlined_call_operand.vmem [shape: s32[64,256], index: 1, kind: output, shape index: {}]
  %s2 = sld [smem:[#allocation0]]
  $region37: #{tpu_custom_call.1} parent=0
    _
  %s4 = ssub.s32 1, %s2
  %s5 = scalar_select 0, %s4, %s2
  loop: start=0, step=1, limit=4
  $region2: #{tpu_custom_call.1} parent=0 // loop_pre_header
    _
  $region3: #{tpu_custom_call.1} parent=0 // loop_header
    %s7 = sphi 0, %s11
    %p8 = scmp.ge.s32.totalorder %s7, 4
    %s14 = sphi 0, %s26
    %s15 = sphi 0, %s22
    %s16 = sphi 0, %s14
    %s17 = sphi 0, %s15
    %s18 = sphi 0, %s16
    %s19 = sphi 0, %s17
    %s27 = sphi 0, %s27
    %s29 = sphi 0, %s27
    %s30 = sphi 0, %s29
    %s44 = sphi 0, %s30
    %s52 = sphi 0, %s54
    %s55 = sphi 0, %s52
    %s56 = sphi 0, %s55
    %s72 = sphi 0, %s56
  $region4: #{tpu_custom_call.1} parent=0 // loop_header_branch
    %10 = sbr.rel (%p8) target = $region8
  $region5: #{tpu_custom_call.1} parent=0 // loop_body
    %s12 = ssub.s32 %s7, 1
    %s13 = ssub.s32 %s7, 2
    %s20 = sadd.s32 1, %s15
    %p21 = scmp.ge.s32.totalorder %s20, 1
    %s22 = scalar_select %p21, 0, %s20
    %s23 = sadd.s32 1, %s14
    %s24 = scalar_select %p21, %s23, %s14
    %p25 = scmp.ge.s32.totalorder %s24, 2
    %s26 = scalar_select %p25, 0, %s24
    %s28 = sadd.s32 %s27, 1
    %p31 = scmp.eq.s32.totalorder %s7, 1
    %p32 = scmp.ne.s32.totalorder %s27, %s29
    %p33 = scmp.eq.s32.totalorder %s7, 0
    %p34 = por %p32, %p33
    %p35 = scmp.ne.s32.totalorder %s27, %s29
    %p36 = scmp.eq.s32.totalorder %s12, 1
    %p37 = por %p35, %p36
    %p38 = scmp.ne.s32.totalorder %s29, %s30
    %p39 = scmp.eq.s32.totalorder %s12, 0
    %p40 = por %p38, %p39
    %p41 = scmp.ne.s32.totalorder %s29, %s30
    %p42 = scmp.eq.s32.totalorder %s13, 1
    %p43 = por %p41, %p42
    %p45 = scmp.ne.s32.totalorder %s30, %s44
    %p46 = scmp.eq.s32.totalorder %s13, 0
    %p47 = por %p45, %p46
    %s48 = ssub.s32 %s14, %s26
    %s49 = ssub.s32 %s15, %s22
    %s50 = sor.u32 %s48, %s49
    %p51 = scmp.eq.s32.totalorder %s50, 0
    %s53 = sadd.s32 %s52, 1
    %s54 = scalar_select %p51, %s52, %s53
    %p57 = pneg %p51
    %p58 = scmp.eq.s32.totalorder %s7, 1
    %p59 = por %p57, %p58
    %p60 = scmp.ne.s32.totalorder %s52, %s55
    %p61 = scmp.eq.s32.totalorder %s7, 0
    %p62 = por %p60, %p61
    %p63 = scmp.ne.s32.totalorder %s52, %s55
    %p64 = scmp.eq.s32.totalorder %s12, 1
    %p65 = por %p63, %p64
    %p66 = scmp.ne.s32.totalorder %s55, %s56
    %p67 = scmp.eq.s32.totalorder %s12, 0
    %p68 = por %p66, %p67
    %p69 = scmp.ne.s32.totalorder %s55, %s56
    %p70 = scmp.eq.s32.totalorder %s13, 1
    %p71 = por %p69, %p70
    %p73 = scmp.ne.s32.totalorder %s56, %s72
    %p74 = scmp.eq.s32.totalorder %s13, 0
    %p75 = por %p73, %p74
    %p76 = scmp.le.s32.totalorder 1, %s7
    %p77 = scmp.lt.s32.totalorder %s7, 3
    %p78 = pnand %p76, %p77
    %p79 = pneg %p78
    // Predicated region
    $region9: #{tpu_custom_call.1} parent=5 // pred_check
      _
    $region10: #{tpu_custom_call.1} parent=5 // pred_check_branch
      %81 = sbr.rel (%p78) target = $region12
    $region11: #{tpu_custom_call.1} parent=5 // pred_region
      %s82 = ssub.s32 %s7, 1
      // Predicated region
      $region13: #{tpu_custom_call.1} parent=11 // pred_check
        %p83 = pneg %p40
      $region14: #{tpu_custom_call.1} parent=11 // pred_check_branch
        %85 = sbr.rel (%p83) target = $region16
      $region15: #{tpu_custom_call.1} parent=11 // pred_region
        _
      $region16: #{tpu_custom_call.1} parent=11 // pred_fallthru
        _
    $region12: #{tpu_custom_call.1} parent=5 // pred_fallthru
      _
    %p86 = scmp.lt.s32.totalorder %s7, 2
    // Predicated region
    $region17: #{tpu_custom_call.1} parent=5 // pred_check
      %p87 = pneg %p86
    $region18: #{tpu_custom_call.1} parent=5 // pred_check_branch
      %89 = sbr.rel (%p87) target = $region20
    $region19: #{tpu_custom_call.1} parent=5 // pred_region
      _
    $region20: #{tpu_custom_call.1} parent=5 // pred_fallthru
      _
    %p90 = scmp.le.s32.totalorder 1, %s7
    %p91 = scmp.lt.s32.totalorder %s7, 3
    %p92 = pnand %p90, %p91
    %p93 = pneg %p92
    // Predicated region
    $region21: #{tpu_custom_call.1} parent=5 // pred_check
      _
    $region22: #{tpu_custom_call.1} parent=5 // pred_check_branch
      %95 = sbr.rel (%p92) target = $region24
    $region23: #{tpu_custom_call.1} parent=5 // pred_region
      %s96 = ssub.s32 %s7, 1
      %p97 = pneg %p40
      %p98 = pneg %p37
      %p99 = pneg %p68
      %p100 = pneg %p65
      %s101 = smul.u32 4, %s16
      %s102 = smul.u32 2, %s17
      %p103 = scmp.lt.s32.totalorder %s101, 7
      %s104 = scalar_select %p103, %s101, 7
      %p105 = scmp.lt.s32.totalorder %s102, 1
      %s106 = scalar_select %p105, %s102, 1
      %s107 = smul.addr %s104, 2
      %s108 = sadd.s32 %s106, %s107
      %s109 = smul.addr %s108, 8
      %s110 = scalar_lea.vmem %s1, %s109
      %s111 = smul.u32 4, %s16
      %s112 = smul.u32 2, %s17
      %p113 = scmp.lt.s32.totalorder %s111, 7
      %s114 = scalar_select %p113, %s111, 7
      %p115 = scmp.lt.s32.totalorder %s112, 1
      %s116 = scalar_select %p115, %s112, 1
      %s117 = smul.addr %s114, 2
      %s118 = sadd.s32 %s116, %s117
      %s119 = smul.addr %s118, 8
      %s120 = scalar_lea.vmem %s1, %s119
      %s121 = smul.u32 4, %s16
      %s122 = smul.u32 2, %s17
      %s123 = smul.u32 %s16, 32
      %s124 = scalar_lea.vmem %s0, %s123
      %v125 = vld [vmem:[%s124] sm:$0xff]
      %v126 = vld [vmem:[%s124 + $0x8] sm:$0xff]
      %v127 = vld [vmem:[%s124 + $0x10] sm:$0xff]
      %v128 = vld [vmem:[%s124 + $0x18] sm:$0xff]
      %s129 = smul.u32 %s17, 256
      %v130 = vlaneseq
      %v131 = vand.u32 %v130, 127
      %v132 = vadd.s32 %v131, 128
      %v133 = vstv %s129
      %v134 = vadd.s32 %v133, %v131
      %v135 = vadd.s32 %v133, %v132
      %136 = vset.pattern.permute.xlu0 0
      %137 = vperm.xlu0 %136, %v125
      %v138 = vpop.permute.xlu0 %137
      %139 = vset.pattern.permute.xlu0 0
      %140 = vperm.xlu0 %139, %v126
      %v141 = vpop.permute.xlu0 %140
      %142 = vset.pattern.permute.xlu0 0
      %143 = vperm.xlu0 %142, %v127
      %v144 = vpop.permute.xlu0 %143
      %145 = vset.pattern.permute.xlu0 0
      %146 = vperm.xlu0 %145, %v128
      %v147 = vpop.permute.xlu0 %146
      %vm148 = vcmp.ge.s32.totalorder %v134, %v138
      %vm149 = vcmp.ge.s32.totalorder %v135, %v138
      %vm150 = vcmp.ge.s32.totalorder %v134, %v141
      %vm151 = vcmp.ge.s32.totalorder %v135, %v141
      %vm152 = vcmp.ge.s32.totalorder %v134, %v144
      %vm153 = vcmp.ge.s32.totalorder %v135, %v144
      %vm154 = vcmp.ge.s32.totalorder %v134, %v147
      %vm155 = vcmp.ge.s32.totalorder %v135, %v147
      %v156 = vsel %vm148, 1, 0
      %v157 = vsel %vm149, 1, 0
      %v158 = vsel %vm150, 1, 0
      %v159 = vsel %vm151, 1, 0
      %v160 = vsel %vm152, 1, 0
      %v161 = vsel %vm153, 1, 0
      %v162 = vsel %vm154, 1, 0
      %v163 = vsel %vm155, 1, 0
      %164 = vst [vmem:[%s120] sm:$0xff] %v156
      %165 = vst [vmem:[%s120 + $0x8] sm:$0xff] %v157
      %166 = vst [vmem:[%s120 + $0x10] sm:$0xff] %v158
      %167 = vst [vmem:[%s120 + $0x18] sm:$0xff] %v159
      %168 = vst [vmem:[%s120 + $0x20] sm:$0xff] %v160
      %169 = vst [vmem:[%s120 + $0x28] sm:$0xff] %v161
      %170 = vst [vmem:[%s120 + $0x30] sm:$0xff] %v162
      %171 = vst [vmem:[%s120 + $0x38] sm:$0xff] %v163
      %s172 = smul.u32 4, %s16
      %s173 = smul.u32 2, %s17
      %p174 = scmp.lt.s32.totalorder %s172, 7
      %s175 = scalar_select %p174, %s172, 7
      %p176 = scmp.lt.s32.totalorder %s173, 1
      %s177 = scalar_select %p176, %s173, 1
      %s178 = smul.addr %s175, 2
      %s179 = sadd.s32 %s177, %s178
      %s180 = smul.addr %s179, 8
      %s181 = scalar_lea.vmem %s1, %s180
      // Predicated region
      $region25: #{tpu_custom_call.1} parent=23 // pred_check
        %p182 = pneg %p65
      $region26: #{tpu_custom_call.1} parent=23 // pred_check_branch
        %184 = sbr.rel (%p182) target = $region28
      $region27: #{tpu_custom_call.1} parent=23 // pred_region
        %s185 = smul.u32 4, %s16
        %s186 = smul.u32 2, %s17
      $region28: #{tpu_custom_call.1} parent=23 // pred_fallthru
        _
    $region24: #{tpu_custom_call.1} parent=5 // pred_fallthru
      _
    %p187 = scmp.le.s32.totalorder 2, %s7
    // Predicated region
    $region29: #{tpu_custom_call.1} parent=5 // pred_check
      %p188 = pneg %p187
    $region30: #{tpu_custom_call.1} parent=5 // pred_check_branch
      %190 = sbr.rel (%p188) target = $region32
    $region31: #{tpu_custom_call.1} parent=5 // pred_region
      %s191 = ssub.s32 %s7, 2
      // Predicated region
      $region33: #{tpu_custom_call.1} parent=31 // pred_check
        %p192 = pneg %p71
      $region34: #{tpu_custom_call.1} parent=31 // pred_check_branch
        %194 = sbr.rel (%p192) target = $region36
      $region35: #{tpu_custom_call.1} parent=31 // pred_region
        %s195 = smul.u32 4, %s18
        %s196 = smul.u32 2, %s19
        %p197 = scmp.lt.s32.totalorder %s195, 7
        %s198 = scalar_select %p197, %s195, 7
        %p199 = scmp.lt.s32.totalorder %s196, 1
        %s200 = scalar_select %p199, %s196, 1
        %s201 = smul.addr %s198, 2
        %s202 = sadd.s32 %s200, %s201
        %s203 = smul.addr %s202, 8
        %s204 = scalar_lea.vmem %s1, %s203
      $region36: #{tpu_custom_call.1} parent=31 // pred_fallthru
        _
    $region32: #{tpu_custom_call.1} parent=5 // pred_fallthru
      _
  $region6: #{tpu_custom_call.1} parent=0 // loop_footer
    %s11 = sadd.s32 1, %s7
  $region7: #{tpu_custom_call.1} parent=0 // loop_footer_branch
    %6 = sbr.rel target = $region3
  $region8: #{tpu_custom_call.1} parent=0 // loop_exit
    _

// kernel: tpu_custom_call.1
$region0: #{tpu_custom_call.1}
  #allocation0 [shape = 'u32[]', space=smem, size = 0x4, offset = 0x4, fixed_abs, tag = 'smem constant byte address 0x4 - core index']
  #allocation1 [shape = 'u32[72,128]{1,0:T(1,128)}', space=vmem, size = 0x9000, scoped, tag = 'internal scratch']
  %s0 = inlined_call_operand.vmem [shape: s32[64,1], index: 0, kind: input, shape index: {}]
  %s1 = inlined_call_operand.hbm [shape: s8[64,256], index: 1, kind: output, shape index: {}]
  %s2 = sld [smem:[#allocation0]]
  $region37: #{tpu_custom_call.1} parent=0
    _
  %s4 = ssub.s32 1, %s2
  %s5 = scalar_select 0, %s4, %s2
  $region1: #{tpu_custom_call.1} parent=0
    #allocation2 [shape = 'u8[16384]{0}', space=vmem, size = 0x4000, scoped, tag = 'output window, operand 0']
    #allocation3 [shape = 's32[2]{0}', space=sflag, size = 0x8, scoped, tag = 'scoped memory for tpu_custom_call.1']
    %6 = vsyncpa [#allocation3], 0
    %s7 = scalar_lea.sflag [#allocation3], 1
    %8 = vsyncpa %s7, 0
    loop: start=0, step=1, limit=4
    $region2: #{tpu_custom_call.1} parent=1 // loop_pre_header
      _
    $region3: #{tpu_custom_call.1} parent=1 // loop_header
      %s10 = sphi 0, %s14
      %p11 = scmp.ge.s32.totalorder %s10, 4
      %s17 = sphi 0, %s29
      %s18 = sphi 0, %s25
      %s19 = sphi 0, %s17
      %s20 = sphi 0, %s18
      %s21 = sphi 0, %s19
      %s22 = sphi 0, %s20
      %s30 = sphi 0, %s30
      %s32 = sphi 0, %s30
      %s33 = sphi 0, %s32
      %s47 = sphi 0, %s33
      %s55 = sphi 0, %s57
      %s58 = sphi 0, %s55
      %s59 = sphi 0, %s58
      %s75 = sphi 0, %s59
    $region4: #{tpu_custom_call.1} parent=1 // loop_header_branch
      %13 = sbr.rel (%p11) target = $region8
    $region5: #{tpu_custom_call.1} parent=1 // loop_body
      %s15 = ssub.s32 %s10, 1
      %s16 = ssub.s32 %s10, 2
      %s23 = sadd.s32 1, %s18
      %p24 = scmp.ge.s32.totalorder %s23, 1
      %s25 = scalar_select %p24, 0, %s23
      %s26 = sadd.s32 1, %s17
      %s27 = scalar_select %p24, %s26, %s17
      %p28 = scmp.ge.s32.totalorder %s27, 2
      %s29 = scalar_select %p28, 0, %s27
      %s31 = sadd.s32 %s30, 1
      %p34 = scmp.eq.s32.totalorder %s10, 1
      %p35 = scmp.ne.s32.totalorder %s30, %s32
      %p36 = scmp.eq.s32.totalorder %s10, 0
      %p37 = por %p35, %p36
      %p38 = scmp.ne.s32.totalorder %s30, %s32
      %p39 = scmp.eq.s32.totalorder %s15, 1
      %p40 = por %p38, %p39
      %p41 = scmp.ne.s32.totalorder %s32, %s33
      %p42 = scmp.eq.s32.totalorder %s15, 0
      %p43 = por %p41, %p42
      %p44 = scmp.ne.s32.totalorder %s32, %s33
      %p45 = scmp.eq.s32.totalorder %s16, 1
      %p46 = por %p44, %p45
      %p48 = scmp.ne.s32.totalorder %s33, %s47
      %p49 = scmp.eq.s32.totalorder %s16, 0
      %p50 = por %p48, %p49
      %s51 = ssub.s32 %s17, %s29
      %s52 = ssub.s32 %s18, %s25
      %s53 = sor.u32 %s51, %s52
      %p54 = scmp.eq.s32.totalorder %s53, 0
      %s56 = sadd.s32 %s55, 1
      %s57 = scalar_select %p54, %s55, %s56
      %p60 = pneg %p54
      %p61 = scmp.eq.s32.totalorder %s10, 1
      %p62 = por %p60, %p61
      %p63 = scmp.ne.s32.totalorder %s55, %s58
      %p64 = scmp.eq.s32.totalorder %s10, 0
      %p65 = por %p63, %p64
      %p66 = scmp.ne.s32.totalorder %s55, %s58
      %p67 = scmp.eq.s32.totalorder %s15, 1
      %p68 = por %p66, %p67
      %p69 = scmp.ne.s32.totalorder %s58, %s59
      %p70 = scmp.eq.s32.totalorder %s15, 0
      %p71 = por %p69, %p70
      %p72 = scmp.ne.s32.totalorder %s58, %s59
      %p73 = scmp.eq.s32.totalorder %s16, 1
      %p74 = por %p72, %p73
      %p76 = scmp.ne.s32.totalorder %s59, %s75
      %p77 = scmp.eq.s32.totalorder %s16, 0
      %p78 = por %p76, %p77
      %p79 = scmp.le.s32.totalorder 1, %s10
      %p80 = scmp.lt.s32.totalorder %s10, 3
      %p81 = pnand %p79, %p80
      %p82 = pneg %p81
      // Predicated region
      $region9: #{tpu_custom_call.1} parent=5 // pred_check
        _
      $region10: #{tpu_custom_call.1} parent=5 // pred_check_branch
        %84 = sbr.rel (%p81) target = $region12
      $region11: #{tpu_custom_call.1} parent=5 // pred_region
        %s85 = ssub.s32 %s10, 1
        // Predicated region
        $region13: #{tpu_custom_call.1} parent=11 // pred_check
          %p86 = pneg %p43
        $region14: #{tpu_custom_call.1} parent=11 // pred_check_branch
          %88 = sbr.rel (%p86) target = $region16
        $region15: #{tpu_custom_call.1} parent=11 // pred_region
          _
        $region16: #{tpu_custom_call.1} parent=11 // pred_fallthru
          _
      $region12: #{tpu_custom_call.1} parent=5 // pred_fallthru
        _
      %p89 = scmp.lt.s32.totalorder %s10, 2
      // Predicated region
      $region17: #{tpu_custom_call.1} parent=5 // pred_check
        %p90 = pneg %p89
      $region18: #{tpu_custom_call.1} parent=5 // pred_check_branch
        %92 = sbr.rel (%p90) target = $region20
      $region19: #{tpu_custom_call.1} parent=5 // pred_region
        _
      $region20: #{tpu_custom_call.1} parent=5 // pred_fallthru
        _
      %p93 = scmp.le.s32.totalorder 1, %s10
      %p94 = scmp.lt.s32.totalorder %s10, 3
      %p95 = pnand %p93, %p94
      %p96 = pneg %p95
      // Predicated region
      $region21: #{tpu_custom_call.1} parent=5 // pred_check
        _
      $region22: #{tpu_custom_call.1} parent=5 // pred_check_branch
        %98 = sbr.rel (%p95) target = $region24
      $region23: #{tpu_custom_call.1} parent=5 // pred_region
        %s99 = ssub.s32 %s10, 1
        %p100 = pneg %p43
        %p101 = pneg %p40
        %p102 = pneg %p71
        %p103 = pneg %p68
        %s104 = sand.u32 %s58, 1
        %s105 = scalar_lea.sflag [#allocation3], %s104
        %s106 = sand.u32 %s58, 1
        %s107 = smul.addr %s106, 16
        %s108 = scalar_lea.vmem [#allocation2], %s107
        %s109 = smul.u32 2, %s20
        %s112 = smul.u32 %s19, 32
        %s113 = scalar_lea.vmem %s0, %s112
        %v114 = vld [vmem:[%s113] sm:$0xff]
        %v115 = vld [vmem:[%s113 + $0x8] sm:$0xff]
        %v116 = vld [vmem:[%s113 + $0x10] sm:$0xff]
        %v117 = vld [vmem:[%s113 + $0x18] sm:$0xff]
        %s118 = smul.u32 %s20, 256
        %v119 = vlaneseq
        %v120 = vand.u32 %v119, 127
        %v121 = vadd.s32 %v120, 128
        %v122 = vstv %s118
        %v123 = vadd.s32 %v122, %v120
        %v124 = vadd.s32 %v122, %v121
        %125 = vset.pattern.permute.xlu0 0
        %126 = vperm.xlu0 %125, %v114
        %v127 = vpop.permute.xlu0 %126
        %128 = vset.pattern.permute.xlu0 0
        %129 = vperm.xlu0 %128, %v115
        %v130 = vpop.permute.xlu0 %129
        %131 = vset.pattern.permute.xlu0 0
        %132 = vperm.xlu0 %131, %v116
        %v133 = vpop.permute.xlu0 %132
        %134 = vset.pattern.permute.xlu0 0
        %135 = vperm.xlu0 %134, %v117
        %v136 = vpop.permute.xlu0 %135
        %vm137 = vcmp.ge.s32.totalorder %v123, %v127
        %vm138 = vcmp.ge.s32.totalorder %v124, %v127
        %vm139 = vcmp.ge.s32.totalorder %v123, %v130
        %vm140 = vcmp.ge.s32.totalorder %v124, %v130
        %vm141 = vcmp.ge.s32.totalorder %v123, %v133
        %vm142 = vcmp.ge.s32.totalorder %v124, %v133
        %vm143 = vcmp.ge.s32.totalorder %v123, %v136
        %vm144 = vcmp.ge.s32.totalorder %v124, %v136
        %vm145 = vmpackc.low %vm139, %vm137
        %vm146 = vmpackc.low %vm143, %vm141
        %v147 = vsel %vm145, 16711935, 0
        %v148 = vsel %vm146, 16711935, 0
        %v149 = vpack.c.b8 %v148, %v147
        %vm150 = vnez %v149
        %vm151 = vmpackc.low %vm140, %vm138
        %vm152 = vmpackc.low %vm144, %vm142
        %v153 = vsel %vm151, 16711935, 0
        %v154 = vsel %vm152, 16711935, 0
        %v155 = vpack.c.b8 %v154, %v153
        %vm156 = vnez %v155
        %v157 = vsel %vm150, 16843009, 0
        %v158 = vsel %vm156, 16843009, 0
        %159 = vst [vmem:[%s108] sm:$0xff] %v157
        %160 = vst [vmem:[%s108 + $0x8] sm:$0xff] %v158
        %s161 = sand.u32 %s58, 1
        %s162 = scalar_lea.sflag [#allocation3], %s161
        %s163 = sand.u32 %s58, 1
        %s164 = smul.addr %s163, 16
        %s165 = scalar_lea.vmem [#allocation2], %s164
        // Predicated region
        $region25: #{tpu_custom_call.1} parent=23 // pred_check
          %p166 = pneg %p68
        $region26: #{tpu_custom_call.1} parent=23 // pred_check_branch
          %168 = sbr.rel (%p166) target = $region28
        $region27: #{tpu_custom_call.1} parent=23 // pred_region
          %s169 = smul.u32 2, %s20
          %171 = vsyncadd %s162, 0
          %s172 = smul.addr %s19, 2
          %s173 = sadd.s32 %s169, %s172
          %s174 = smul.addr %s173, 8
          %s175 = scalar_lea.hbm %s1, %s174
          %s177 = sshll.u32 %s165, 4
          %s178 = int_to_ptr.vmem [resolvable:$true] %s177
          %s179 = sshll.u32 %s175, 4
          %s180 = int_to_ptr.hbm [resolvable:$true] %s179
          %182 = dma.vmem_to_hbm [thread:$0]  %s178, 256, %s180, %s162
        $region28: #{tpu_custom_call.1} parent=23 // pred_fallthru
          _
      $region24: #{tpu_custom_call.1} parent=5 // pred_fallthru
        _
      %p183 = scmp.le.s32.totalorder 2, %s10
      // Predicated region
      $region29: #{tpu_custom_call.1} parent=5 // pred_check
        %p184 = pneg %p183
      $region30: #{tpu_custom_call.1} parent=5 // pred_check_branch
        %186 = sbr.rel (%p184) target = $region32
      $region31: #{tpu_custom_call.1} parent=5 // pred_region
        %s187 = ssub.s32 %s10, 2
        // Predicated region
        $region33: #{tpu_custom_call.1} parent=31 // pred_check
          %p188 = pneg %p74
        $region34: #{tpu_custom_call.1} parent=31 // pred_check_branch
          %190 = sbr.rel (%p188) target = $region36
        $region35: #{tpu_custom_call.1} parent=31 // pred_region
          %s191 = sand.u32 %s59, 1
          %s192 = scalar_lea.sflag [#allocation3], %s191
          %s193 = sand.u32 %s59, 1
          %s194 = smul.addr %s193, 16
          %s195 = scalar_lea.vmem [#allocation2], %s194
          %197 = dma.done %s192, 256
        $region36: #{tpu_custom_call.1} parent=31 // pred_fallthru
          _
      $region32: #{tpu_custom_call.1} parent=5 // pred_fallthru
        _
    $region6: #{tpu_custom_call.1} parent=1 // loop_footer
      %s14 = sadd.s32 1, %s10
    $region7: #{tpu_custom_call.1} parent=1 // loop_footer_branch
      %9 = sbr.rel target = $region3
    $region8: #{tpu_custom_call.1} parent=1 // loop_exit
      _
    %198 = vsyncpa [#allocation3], 1
    %s199 = scalar_lea.sflag [#allocation3], 1
    %200 = vsyncpa %s199, 1

</llo_original>
